<compile_context>
chip_gen: v7x
topology: tpu7x:2x2x1
jax: 0.10.0
libtpu: 0.0.40
codegen_flags: <defaults>
</compile_context>

<pallas_src>
import jax
import jax.numpy as jnp
from jax.experimental import pallas as pl
from jax.experimental.pallas import tpu as pltpu

# ResTiny hidden sizes (fixed by the PyTorch module).
H1, H2, H3, H4 = 96, 48, 24, 12
W_LANES = 256          # packed weight-slab width (fused w1|wr needs 128 + 48 lanes)
RES_LANE = 128         # lane offset of the residual weight inside the fused slab


def _round_up(v, m):
    return (v + m - 1) // m * m


def _slab_offsets(d_in):
    """Row offsets of each weight inside the packed bf16 slab (multiples of 16)."""
    r2 = _round_up(d_in, 16)          # w2  (H1, H2)
    r3 = _round_up(r2 + H1, 16)       # w3  (H2, H3)
    r4 = _round_up(r3 + H2, 16)       # w4  (H3, H4)
    rows = _round_up(r4 + H3, 16)
    return r2, r3, r4, rows


def _make_kernel(d_in):
    r2, r3, r4, _ = _slab_offsets(d_in)

    def kernel(x_ref, w_ref, c_ref, out_ref):
        xb = x_ref[...]                                               # (TB, d_in) bf16

        # fc1 + res fused into one (d_in, 256) bf16 matmul (f32 accumulation):
        # lanes 0:96 = fc1 pre-activation, lanes 128:176 = residual projection.
        f = jnp.dot(xb, w_ref[0:d_in, :], preferred_element_type=jnp.float32)
        h = jnp.maximum(f[:, 0:H1] + c_ref[0:1, 0:H1], 0.0)           # (TB, 96) f32
        res = f[:, RES_LANE:RES_LANE + H2]                            # (TB, 48) f32

        # fc2(h) + res -> ReLU
        h = (jnp.dot(h.astype(jnp.bfloat16), w_ref[r2:r2 + H1, 0:H2],
                     preferred_element_type=jnp.float32)
             + c_ref[1:2, 0:H2] + res)
        h = jnp.maximum(h, 0.0)                                       # (TB, 48)

        # fc3 -> ReLU
        h = (jnp.dot(h.astype(jnp.bfloat16), w_ref[r3:r3 + H2, 0:H3],
                     preferred_element_type=jnp.float32)
             + c_ref[2:3, 0:H3])
        h = jnp.maximum(h, 0.0)                                       # (TB, 24)

        # fc4 -> ReLU
        h = (jnp.dot(h.astype(jnp.bfloat16), w_ref[r4:r4 + H3, 0:H4],
                     preferred_element_type=jnp.float32)
             + c_ref[3:4, 0:H4])
        h = jnp.maximum(h, 0.0)                                       # (TB, 12) f32

        # Head Linear(12 -> 1): K=12/N=1 wastes the MXU, so do it on the VPU/XLU.
        logits = (jnp.sum(h * c_ref[4:5, 0:H4], axis=-1, keepdims=True)
                  + c_ref[5:6, 0:1])                                  # (TB, 1)

        # Exact sigmoid (the MXU slot is binding, not this epilogue).
        out_ref[...] = 1.0 / (1.0 + jnp.exp(-logits))

    return kernel


def pack_params(params, d_in=24):
    """Pack the 11 ResTiny tensors into one bf16 weight slab + one f32 const block.

    Weight slab (rows, 256) bf16:
      rows [0, d_in)        lanes 0:96  = w1,  lanes 128:176 = wr   (fused fc1|res)
      rows [r2, r2+96)      lanes 0:48  = w2
      rows [r3, r3+48)      lanes 0:24  = w3
      rows [r4, r4+24)      lanes 0:12  = w4
    Const block (8, 256) f32: rows 0..5 = b1, b2, b3, b4, wo-row, bo.
    """
    r2, r3, r4, rows = _slab_offsets(d_in)

    w = jnp.zeros((rows, W_LANES), jnp.float32)
    w = w.at[0:d_in, 0:H1].set(params["w1"])
    w = w.at[0:d_in, RES_LANE:RES_LANE + H2].set(params["wr"])
    w = w.at[r2:r2 + H1, 0:H2].set(params["w2"])
    w = w.at[r3:r3 + H2, 0:H3].set(params["w3"])
    w = w.at[r4:r4 + H3, 0:H4].set(params["w4"])
    w = w.astype(jnp.bfloat16)

    c = jnp.zeros((8, W_LANES), jnp.float32)
    c = c.at[0, 0:H1].set(params["b1"].reshape(-1))
    c = c.at[1, 0:H2].set(params["b2"].reshape(-1))
    c = c.at[2, 0:H3].set(params["b3"].reshape(-1))
    c = c.at[3, 0:H4].set(params["b4"].reshape(-1))
    c = c.at[4, 0:H4].set(params["wo"].reshape(-1))
    c = c.at[5, 0].set(params["bo"][0, 0])
    return w, c


def _pick_tb(B, block_batch):
    """Batch tile: big (amortize ~0.35us/step), multiple of 16 sublanes (bf16 x),
    and >= 2 grid steps when the batch allows it (v7x megacore split)."""
    if B <= 16:
        return B
    if block_batch >= B:
        tb = _round_up(-(-B // 2), 16)
    else:
        tb = _round_up(block_batch, 16)
    return tb if tb < B else B


def restiny_forward(x, packed_params, *, block_batch=4096):
    """x: (B, d_in) float32/bfloat16; packed_params: output of pack_params."""
    w_slab, consts = packed_params
    B, d_in = x.shape
    TB = _pick_tb(B, block_batch)
    grid = (pl.cdiv(B, TB),)

    # bf16 operands feed the MXU in a single pass (f32 operands cost ~3x emulation
    # passes) and halve the x HBM stream.
    # TODO(synk): ideally the caller supplies x already in bf16 so HBM reads shrink
    #             upstream of this cast as well.
    x = x.astype(jnp.bfloat16)

    kernel = _make_kernel(d_in)

    # Advisory cost estimate for the XLA scheduler.
    flops = 2 * B * (d_in * (H1 + H2) + H1 * H2 + H2 * H3 + H3 * H4 + H4)
    bytes_accessed = (B * d_in * 2 + B * 4
                      + int(w_slab.size) * 2 + int(consts.size) * 4)
    cost = pl.CostEstimate(flops=flops, transcendentals=B,
                           bytes_accessed=bytes_accessed)

    return pl.pallas_call(
        kernel,
        out_shape=jax.ShapeDtypeStruct((B, 1), jnp.float32),
        grid=grid,
        in_specs=[
            # x tiles: auto double-buffered HBM<->VMEM across the batch grid.
            pl.BlockSpec((TB, d_in), lambda i: (i, 0)),
            # Packed weights / constants: full-extent block, constant index_map
            # -> DMA'd once, resident across all grid steps.
            pl.BlockSpec(w_slab.shape, lambda i: (0, 0)),
            pl.BlockSpec(consts.shape, lambda i: (0, 0)),
        ],
        out_specs=pl.BlockSpec((TB, 1), lambda i: (i, 0)),
        compiler_params=pltpu.CompilerParams(
            # Batch tiles are independent -> shard across TCs on v7x megacore.
            dimension_semantics=("parallel",),
            # Safe on v5e/v6e (128 MiB) and v7x (64 MiB) at TB<=4096; on v5e/v6e this
            # can be raised to 48-64 MiB together with block_batch=8192.
            vmem_limit_bytes=32 * 1024 * 1024,
        ),
        cost_estimate=cost,
    )(x, w_slab, consts)


def init_params(key, d_in=24):
    """Deterministic init. Hidden weights stored as (in, out) = PyTorch weight.T;
    the head weight `wo` is a (1, 12) row (PyTorch-native) for the VPU reduction."""
    dims = {
        "w1": (d_in, H1), "b1": (1, H1),
        "w2": (H1, H2),   "b2": (1, H2),
        "wr": (d_in, H2),                 # res: Linear(d_in, 48, bias=False)
        "w3": (H2, H3),   "b3": (1, H3),
        "w4": (H3, H4),   "b4": (1, H4),
        "wo": (1, H4),    "bo": (1, 1),
    }
    params = {}
    for name, shape in dims.items():
        key, sub = jax.random.split(key)
        if name.startswith("w"):
            fan_in = shape[1] if name == "wo" else shape[0]
        else:
            fan_in = 1
        scale = 1.0 / jnp.sqrt(jnp.float32(max(fan_in, 1)))
        params[name] = (jax.random.uniform(sub, shape, jnp.float32,
                                           minval=-1.0, maxval=1.0) * scale)
    return params


def restiny_ref(x, p):
    """Pure-JAX reference of the PyTorch forward (eval mode), using the same bf16
    matmul operands / f32 accumulation as the kernel."""
    def dot(a, b):
        return jnp.dot(a.astype(jnp.bfloat16), b.astype(jnp.bfloat16),
                       preferred_element_type=jnp.float32)
    h = jnp.maximum(dot(x, p["w1"]) + p["b1"], 0.0)
    h = jnp.maximum(dot(h, p["w2"]) + p["b2"] + dot(x, p["wr"]), 0.0)
    h = jnp.maximum(dot(h, p["w3"]) + p["b3"], 0.0)
    h = jnp.maximum(dot(h, p["w4"]) + p["b4"], 0.0)
    logits = jnp.sum(h * p["wo"], axis=-1, keepdims=True) + p["bo"]
    return jax.nn.sigmoid(logits)


if __name__ == "__main__":
    key = jax.random.PRNGKey(0)
    k_x, k_p = jax.random.split(key)

    d_in, batch = 24, 64
    x = jax.random.normal(k_x, (batch, d_in), jnp.float32)
    params = init_params(k_p, d_in=d_in)
    packed = pack_params(params, d_in=d_in)

    # Small block so the test exercises multiple pipelined grid steps (4 here);
    # production callers leave block_batch at its 4096 default.
    out = restiny_forward(x, packed, block_batch=16)
    out = jax.block_until_ready(out)

    ref = restiny_ref(x, params)
    assert out.shape == (batch, 1)
    # Kernel and reference use identical bf16-operand / f32-accumulation math; only
    # accumulation order differs, so 5e-3 on a [0,1] sigmoid output is comfortable.
    assert jnp.allclose(out, ref, atol=5e-3, rtol=5e-3), "mismatch vs JAX reference"

    print("KERNEL_OK")
</pallas_src>

<mosaic_0001>
module attributes {stable_mosaic.version = 11 : i64} {
  func.func @kernel(%arg0: i32, %arg1: memref<16x24xbf16, #tpu.memory_space<vmem>>, %arg2: memref<208x256xbf16, #tpu.memory_space<vmem>>, %arg3: memref<8x256xf32, #tpu.memory_space<vmem>>, %arg4: memref<16x1xf32, #tpu.memory_space<vmem>>) attributes {dimension_semantics = [#tpu.dimension_semantics<parallel>], iteration_bounds = array<i64: 4>, scalar_prefetch = 0 : i64, scratch_operands = 0 : i64, tpu.core_type = #tpu.core_type<tc>, window_params = [{transform_indices = @transform_0, window_bounds = array<i64: 16, 24>}, {pipeline_mode = #tpu.pipeline_mode<synchronous>, transform_indices = @transform_1, window_bounds = array<i64: 208, 256>}, {pipeline_mode = #tpu.pipeline_mode<synchronous>, transform_indices = @transform_2, window_bounds = array<i64: 8, 256>}, {transform_indices = @transform_3, window_bounds = array<i64: 16, 1>}]} {
    %c0 = arith.constant 0 : index
    %c0_0 = arith.constant 0 : index
    %0 = vector.load %arg1[%c0, %c0_0] : memref<16x24xbf16, #tpu.memory_space<vmem>>, vector<16x24xbf16>
    %c0_1 = arith.constant 0 : index
    %c0_2 = arith.constant 0 : index
    %1 = vector.load %arg2[%c0_1, %c0_2] : memref<208x256xbf16, #tpu.memory_space<vmem>>, vector<24x256xbf16>
    %cst = arith.constant dense<0.000000e+00> : vector<16x256xf32>
    %2 = tpu.matmul %0, %1, %cst {dimension_numbers = #tpu.dot_dimension_numbers<[1], [0], [0], [1], [0, 0, 1, 1], [], []>} : vector<16x24xbf16>, vector<24x256xbf16>, vector<16x256xf32> -> vector<16x256xf32>
    %3 = vector.extract_strided_slice %2 {offsets = [0, 0], sizes = [16, 96], strides = [1, 1]} : vector<16x256xf32> to vector<16x96xf32>
    %c0_3 = arith.constant 0 : index
    %c0_4 = arith.constant 0 : index
    %4 = vector.load %arg3[%c0_3, %c0_4] : memref<8x256xf32, #tpu.memory_space<vmem>>, vector<1x96xf32>
    %5 = vector.broadcast %4 : vector<1x96xf32> to vector<16x96xf32>
    %6 = arith.addf %3, %5 : vector<16x96xf32>
    %cst_5 = arith.constant 0.000000e+00 : f32
    %7 = vector.broadcast %cst_5 : f32 to vector<16x96xf32>
    %8 = arith.maximumf %6, %7 : vector<16x96xf32>
    %9 = vector.extract_strided_slice %2 {offsets = [0, 128], sizes = [16, 48], strides = [1, 1]} : vector<16x256xf32> to vector<16x48xf32>
    %10 = arith.truncf %8 : vector<16x96xf32> to vector<16x96xbf16>
    %c32 = arith.constant 32 : index
    %c0_6 = arith.constant 0 : index
    %11 = vector.load %arg2[%c32, %c0_6] : memref<208x256xbf16, #tpu.memory_space<vmem>>, vector<96x48xbf16>
    %cst_7 = arith.constant dense<0.000000e+00> : vector<16x48xf32>
    %12 = tpu.matmul %10, %11, %cst_7 {dimension_numbers = #tpu.dot_dimension_numbers<[1], [0], [0], [1], [0, 0, 1, 1], [], []>} : vector<16x96xbf16>, vector<96x48xbf16>, vector<16x48xf32> -> vector<16x48xf32>
    %c1 = arith.constant 1 : index
    %c0_8 = arith.constant 0 : index
    %13 = vector.load %arg3[%c1, %c0_8] : memref<8x256xf32, #tpu.memory_space<vmem>>, vector<1x48xf32>
    %14 = vector.broadcast %13 : vector<1x48xf32> to vector<16x48xf32>
    %15 = arith.addf %12, %14 : vector<16x48xf32>
    %16 = arith.addf %15, %9 : vector<16x48xf32>
    %cst_9 = arith.constant 0.000000e+00 : f32
    %17 = vector.broadcast %cst_9 : f32 to vector<16x48xf32>
    %18 = arith.maximumf %16, %17 : vector<16x48xf32>
    %19 = arith.truncf %18 : vector<16x48xf32> to vector<16x48xbf16>
    %c128 = arith.constant 128 : index
    %c0_10 = arith.constant 0 : index
    %20 = vector.load %arg2[%c128, %c0_10] : memref<208x256xbf16, #tpu.memory_space<vmem>>, vector<48x24xbf16>
    %cst_11 = arith.constant dense<0.000000e+00> : vector<16x24xf32>
    %21 = tpu.matmul %19, %20, %cst_11 {dimension_numbers = #tpu.dot_dimension_numbers<[1], [0], [0], [1], [0, 0, 1, 1], [], []>} : vector<16x48xbf16>, vector<48x24xbf16>, vector<16x24xf32> -> vector<16x24xf32>
    %c2 = arith.constant 2 : index
    %c0_12 = arith.constant 0 : index
    %22 = vector.load %arg3[%c2, %c0_12] : memref<8x256xf32, #tpu.memory_space<vmem>>, vector<1x24xf32>
    %23 = vector.broadcast %22 : vector<1x24xf32> to vector<16x24xf32>
    %24 = arith.addf %21, %23 : vector<16x24xf32>
    %cst_13 = arith.constant 0.000000e+00 : f32
    %25 = vector.broadcast %cst_13 : f32 to vector<16x24xf32>
    %26 = arith.maximumf %24, %25 : vector<16x24xf32>
    %27 = arith.truncf %26 : vector<16x24xf32> to vector<16x24xbf16>
    %c176 = arith.constant 176 : index
    %c0_14 = arith.constant 0 : index
    %28 = vector.load %arg2[%c176, %c0_14] : memref<208x256xbf16, #tpu.memory_space<vmem>>, vector<24x12xbf16>
    %cst_15 = arith.constant dense<0.000000e+00> : vector<16x12xf32>
    %29 = tpu.matmul %27, %28, %cst_15 {dimension_numbers = #tpu.dot_dimension_numbers<[1], [0], [0], [1], [0, 0, 1, 1], [], []>} : vector<16x24xbf16>, vector<24x12xbf16>, vector<16x12xf32> -> vector<16x12xf32>
    %c3 = arith.constant 3 : index
    %c0_16 = arith.constant 0 : index
    %30 = vector.load %arg3[%c3, %c0_16] : memref<8x256xf32, #tpu.memory_space<vmem>>, vector<1x12xf32>
    %31 = vector.broadcast %30 : vector<1x12xf32> to vector<16x12xf32>
    %32 = arith.addf %29, %31 : vector<16x12xf32>
    %cst_17 = arith.constant 0.000000e+00 : f32
    %33 = vector.broadcast %cst_17 : f32 to vector<16x12xf32>
    %34 = arith.maximumf %32, %33 : vector<16x12xf32>
    %c4 = arith.constant 4 : index
    %c0_18 = arith.constant 0 : index
    %35 = vector.load %arg3[%c4, %c0_18] : memref<8x256xf32, #tpu.memory_space<vmem>>, vector<1x12xf32>
    %36 = vector.broadcast %35 : vector<1x12xf32> to vector<16x12xf32>
    %37 = arith.mulf %34, %36 : vector<16x12xf32>
    %cst_19 = arith.constant dense<0.000000e+00> : vector<16xf32>
    %38 = vector.multi_reduction <add>, %37, %cst_19 [1] : vector<16x12xf32> to vector<16xf32>
    %39 = vector.shape_cast %38 : vector<16xf32> to vector<16x1xf32>
    %c5 = arith.constant 5 : index
    %c0_20 = arith.constant 0 : index
    %40 = vector.load %arg3[%c5, %c0_20] : memref<8x256xf32, #tpu.memory_space<vmem>>, vector<1x1xf32>
    %41 = vector.broadcast %40 : vector<1x1xf32> to vector<16x1xf32>
    %42 = arith.addf %39, %41 : vector<16x1xf32>
    %cst_21 = arith.constant 0.000000e+00 : f32
    %43 = vector.broadcast %cst_21 : f32 to vector<16x1xf32>
    %44 = arith.subf %43, %42 : vector<16x1xf32>
    %45 = math.exp %44 : vector<16x1xf32>
    %cst_22 = arith.constant 1.000000e+00 : f32
    %46 = vector.broadcast %cst_22 : f32 to vector<16x1xf32>
    %47 = arith.addf %46, %45 : vector<16x1xf32>
    %cst_23 = arith.constant 1.000000e+00 : f32
    %48 = vector.broadcast %cst_23 : f32 to vector<16x1xf32>
    %49 = arith.divf %48, %47 : vector<16x1xf32>
    %c0_24 = arith.constant 0 : index
    %c0_25 = arith.constant 0 : index
    %50 = vector.load %arg4[%c0_24, %c0_25] : memref<16x1xf32, #tpu.memory_space<vmem>>, vector<16x1xf32>
    tpu.vector_store %arg4[%c0_24, %c0_25], %49 {strides = array<i32>} : memref<16x1xf32, #tpu.memory_space<vmem>>, vector<16x1xf32>,
    return
  }
  func.func @transform_0(%arg0: i32) -> (i32, i32) {
    %c0_i32 = arith.constant 0 : i32
    %c0_i32_0 = arith.constant 0 : i32
    return %arg0, %c0_i32 : i32, i32
  }
  func.func @transform_1(%arg0: i32) -> (i32, i32) {
    %c0_i32 = arith.constant 0 : i32
    %c0_i32_0 = arith.constant 0 : i32
    %c0_i32_1 = arith.constant 0 : i32
    return %c0_i32, %c0_i32_0 : i32, i32
  }
  func.func @transform_2(%arg0: i32) -> (i32, i32) {
    %c0_i32 = arith.constant 0 : i32
    %c0_i32_0 = arith.constant 0 : i32
    %c0_i32_1 = arith.constant 0 : i32
    return %c0_i32, %c0_i32_0 : i32, i32
  }
  func.func @transform_3(%arg0: i32) -> (i32, i32) {
    %c0_i32 = arith.constant 0 : i32
    %c0_i32_0 = arith.constant 0 : i32
    return %arg0, %c0_i32 : i32, i32
  }
}

</mosaic_0001>

<llo_original>
// kernel: tpu_custom_call.1
$region0: #{tpu_custom_call.1}
  #allocation0 [shape = 'u32[]', space=smem, size = 0x4, offset = 0x4, fixed_abs, tag = 'smem constant byte address 0x4 - core index']
  #allocation1 [shape = 'u32[144,128]{1,0:T(1,128)}', space=vmem, size = 0x12000, scoped, tag = 'internal scratch']
  %s0 = inlined_call_operand.vmem [shape: bf16[64,24], index: 0, kind: input, shape index: {}]
  %s1 = inlined_call_operand.hbm [shape: bf16[208,256], index: 1, kind: input, shape index: {}]
  %s2 = inlined_call_operand.vmem [shape: f32[8,256], index: 2, kind: input, shape index: {}]
  %s3 = inlined_call_operand.vmem [shape: f32[64,1], index: 3, kind: output, shape index: {}]
  %s4 = sld [smem:[#allocation0]]
  $region49: #{tpu_custom_call.1} parent=0
    _
  %s6 = ssub.s32 1, %s4
  %s7 = scalar_select 0, %s6, %s4
  $region1: #{tpu_custom_call.1} parent=0
    #allocation2 [shape = 'u8[106496]{0}', space=vmem, size = 0x1a000, scoped, tag = 'input window, operand 1, single buffered']
    #allocation3 [shape = 's32[2]{0}', space=sflag, size = 0x8, scoped, tag = 'scoped memory for tpu_custom_call.1']
    %8 = vsyncpa [#allocation3], 0
    loop: start=0, step=1, limit=6
    $region2: #{tpu_custom_call.1} parent=1 // loop_pre_header
      _
    $region3: #{tpu_custom_call.1} parent=1 // loop_header
      %s10 = sphi 0, %s14
      %p11 = scmp.ge.s32.totalorder %s10, 6
      %s20 = sphi 0, %s22
      %s23 = sphi 0, %s20
      %s24 = sphi 0, %s23
      %s40 = sphi 0, %s24
      %s44 = sphi 0, %s44
      %s46 = sphi 0, %s44
      %s47 = sphi 0, %s46
      %s61 = sphi 0, %s47
      %s65 = sphi 0, %s65
      %s67 = sphi 0, %s65
      %s68 = sphi 0, %s67
      %s82 = sphi 0, %s68
      %s88 = sphi 0, %s90
      %s91 = sphi 0, %s88
      %s92 = sphi 0, %s91
      %s108 = sphi 0, %s92
    $region4: #{tpu_custom_call.1} parent=1 // loop_header_branch
      %13 = sbr.rel (%p11) target = $region8
    $region5: #{tpu_custom_call.1} parent=1 // loop_body
      %s15 = ssub.s32 %s10, 1
      %s16 = ssub.s32 %s10, 2
      %s17 = sadd.s32 %s10, 1
      %s18 = ssub.s32 %s10, %s17
      %p19 = scmp.eq.s32.totalorder %s18, 0
      %s21 = sadd.s32 %s20, 1
      %s22 = scalar_select %p19, %s20, %s21
      %p25 = pneg %p19
      %p26 = scmp.eq.s32.totalorder %s10, 3
      %p27 = por %p25, %p26
      %p28 = scmp.ne.s32.totalorder %s20, %s23
      %p29 = scmp.eq.s32.totalorder %s10, 0
      %p30 = por %p28, %p29
      %p31 = scmp.ne.s32.totalorder %s20, %s23
      %p32 = scmp.eq.s32.totalorder %s15, 3
      %p33 = por %p31, %p32
      %p34 = scmp.ne.s32.totalorder %s23, %s24
      %p35 = scmp.eq.s32.totalorder %s15, 0
      %p36 = por %p34, %p35
      %p37 = scmp.ne.s32.totalorder %s23, %s24
      %p38 = scmp.eq.s32.totalorder %s16, 3
      %p39 = por %p37, %p38
      %p41 = scmp.ne.s32.totalorder %s24, %s40
      %p42 = scmp.eq.s32.totalorder %s16, 0
      %p43 = por %p41, %p42
      %s45 = sadd.s32 %s44, 1
      %p48 = scmp.eq.s32.totalorder %s10, 3
      %p49 = scmp.ne.s32.totalorder %s44, %s46
      %p50 = scmp.eq.s32.totalorder %s10, 0
      %p51 = por %p49, %p50
      %p52 = scmp.ne.s32.totalorder %s44, %s46
      %p53 = scmp.eq.s32.totalorder %s15, 3
      %p54 = por %p52, %p53
      %p55 = scmp.ne.s32.totalorder %s46, %s47
      %p56 = scmp.eq.s32.totalorder %s15, 0
      %p57 = por %p55, %p56
      %p58 = scmp.ne.s32.totalorder %s46, %s47
      %p59 = scmp.eq.s32.totalorder %s16, 3
      %p60 = por %p58, %p59
      %p62 = scmp.ne.s32.totalorder %s47, %s61
      %p63 = scmp.eq.s32.totalorder %s16, 0
      %p64 = por %p62, %p63
      %s66 = sadd.s32 %s65, 1
      %p69 = scmp.eq.s32.totalorder %s10, 3
      %p70 = scmp.ne.s32.totalorder %s65, %s67
      %p71 = scmp.eq.s32.totalorder %s10, 0
      %p72 = por %p70, %p71
      %p73 = scmp.ne.s32.totalorder %s65, %s67
      %p74 = scmp.eq.s32.totalorder %s15, 3
      %p75 = por %p73, %p74
      %p76 = scmp.ne.s32.totalorder %s67, %s68
      %p77 = scmp.eq.s32.totalorder %s15, 0
      %p78 = por %p76, %p77
      %p79 = scmp.ne.s32.totalorder %s67, %s68
      %p80 = scmp.eq.s32.totalorder %s16, 3
      %p81 = por %p79, %p80
      %p83 = scmp.ne.s32.totalorder %s68, %s82
      %p84 = scmp.eq.s32.totalorder %s16, 0
      %p85 = por %p83, %p84
      %s86 = ssub.s32 %s10, %s17
      %p87 = scmp.eq.s32.totalorder %s86, 0
      %s89 = sadd.s32 %s88, 1
      %s90 = scalar_select %p87, %s88, %s89
      %p93 = pneg %p87
      %p94 = scmp.eq.s32.totalorder %s10, 3
      %p95 = por %p93, %p94
      %p96 = scmp.ne.s32.totalorder %s88, %s91
      %p97 = scmp.eq.s32.totalorder %s10, 0
      %p98 = por %p96, %p97
      %p99 = scmp.ne.s32.totalorder %s88, %s91
      %p100 = scmp.eq.s32.totalorder %s15, 3
      %p101 = por %p99, %p100
      %p102 = scmp.ne.s32.totalorder %s91, %s92
      %p103 = scmp.eq.s32.totalorder %s15, 0
      %p104 = por %p102, %p103
      %p105 = scmp.ne.s32.totalorder %s91, %s92
      %p106 = scmp.eq.s32.totalorder %s16, 3
      %p107 = por %p105, %p106
      %p109 = scmp.ne.s32.totalorder %s92, %s108
      %p110 = scmp.eq.s32.totalorder %s16, 0
      %p111 = por %p109, %p110
      %p112 = scmp.le.s32.totalorder 1, %s10
      %p113 = scmp.lt.s32.totalorder %s10, 5
      %p114 = pnand %p112, %p113
      %p115 = pneg %p114
      // Predicated region
      $region9: #{tpu_custom_call.1} parent=5 // pred_check
        _
      $region10: #{tpu_custom_call.1} parent=5 // pred_check_branch
        %117 = sbr.rel (%p114) target = $region12
      $region11: #{tpu_custom_call.1} parent=5 // pred_region
        %s118 = ssub.s32 %s10, 1
        // Predicated region
        $region13: #{tpu_custom_call.1} parent=11 // pred_check
          %p119 = pneg %p57
        $region14: #{tpu_custom_call.1} parent=11 // pred_check_branch
          %121 = sbr.rel (%p119) target = $region16
        $region15: #{tpu_custom_call.1} parent=11 // pred_region
          %s123 = ssub.s32 3328, 3328
          %124 = vsyncadd [#allocation3], %s123
          %s125 = sshll.u32 [#allocation2], 4
          %s126 = int_to_ptr.vmem [resolvable:$true] %s125
          %131 = dma.hbm_to_vmem [thread:$0]  %s1, 3328, %s126, [#allocation3], 128, 128, 8
        $region16: #{tpu_custom_call.1} parent=11 // pred_fallthru
          _
        // Predicated region
        $region17: #{tpu_custom_call.1} parent=11 // pred_check
          %p132 = pneg %p78
        $region18: #{tpu_custom_call.1} parent=11 // pred_check_branch
          %134 = sbr.rel (%p132) target = $region20
        $region19: #{tpu_custom_call.1} parent=11 // pred_region
          _
        $region20: #{tpu_custom_call.1} parent=11 // pred_fallthru
          _
      $region12: #{tpu_custom_call.1} parent=5 // pred_fallthru
        _
      %p135 = scmp.lt.s32.totalorder %s10, 4
      // Predicated region
      $region21: #{tpu_custom_call.1} parent=5 // pred_check
        %p136 = pneg %p135
      $region22: #{tpu_custom_call.1} parent=5 // pred_check_branch
        %138 = sbr.rel (%p136) target = $region24
      $region23: #{tpu_custom_call.1} parent=5 // pred_region
        // Predicated region
        $region25: #{tpu_custom_call.1} parent=23 // pred_check
          %p139 = pneg %p30
        $region26: #{tpu_custom_call.1} parent=23 // pred_check_branch
          %141 = sbr.rel (%p139) target = $region28
        $region27: #{tpu_custom_call.1} parent=23 // pred_region
          %s142 = smul.u32 2, %s10
          %p143 = scmp.lt.s32.totalorder %s142, 7
          %s144 = scalar_select %p143, %s142, 7
          %s145 = smul.addr %s144, 4
          %s146 = scalar_lea.vmem %s0, %s145
          %s147 = smul.u32 2, %s10
        $region28: #{tpu_custom_call.1} parent=23 // pred_fallthru
          _
      $region24: #{tpu_custom_call.1} parent=5 // pred_fallthru
        _
      %p148 = scmp.le.s32.totalorder 1, %s10
      %p149 = scmp.lt.s32.totalorder %s10, 5
      %p150 = pnand %p148, %p149
      %p151 = pneg %p150
      // Predicated region
      $region29: #{tpu_custom_call.1} parent=5 // pred_check
        _
      $region30: #{tpu_custom_call.1} parent=5 // pred_check_branch
        %153 = sbr.rel (%p150) target = $region32
      $region31: #{tpu_custom_call.1} parent=5 // pred_region
        %s154 = ssub.s32 %s10, 1
        // Predicated region
        $region33: #{tpu_custom_call.1} parent=31 // pred_check
          %p155 = pneg %p57
        $region34: #{tpu_custom_call.1} parent=31 // pred_check_branch
          %157 = sbr.rel (%p155) target = $region36
        $region35: #{tpu_custom_call.1} parent=31 // pred_region
          %158 = dma.done [#allocation3], 3328
        $region36: #{tpu_custom_call.1} parent=31 // pred_fallthru
          _
        %s159 = smul.u32 2, %s15
        %p160 = scmp.lt.s32.totalorder %s159, 7
        %s161 = scalar_select %p160, %s159, 7
        %s162 = smul.addr %s161, 4
        %s163 = scalar_lea.vmem %s0, %s162
        %p164 = pneg %p36
        %p165 = pneg %p33
        %p166 = pneg %p57
        %p167 = pneg %p54
        %p168 = pneg %p78
        %p169 = pneg %p75
        %p170 = pneg %p104
        %p171 = pneg %p101
        %s172 = smul.u32 2, %s15
        %p173 = scmp.lt.s32.totalorder %s172, 7
        %s174 = scalar_select %p173, %s172, 7
        %s175 = smul.addr %s174, 8
        %s176 = scalar_lea.vmem %s3, %s175
        %s177 = smul.u32 2, %s15
        %p178 = scmp.lt.s32.totalorder %s177, 7
        %s179 = scalar_select %p178, %s177, 7
        %s180 = smul.addr %s179, 4
        %s181 = scalar_lea.vmem %s0, %s180
        %s182 = smul.u32 2, %s15
        %s183 = smul.u32 2, %s15
        %p184 = scmp.lt.s32.totalorder %s183, 7
        %s185 = scalar_select %p184, %s183, 7
        %s186 = smul.addr %s185, 8
        %s187 = scalar_lea.vmem %s3, %s186
        %s188 = smul.u32 2, %s15
        %v190 = vld [vmem:[%s181] sm:$0xf]
        %v191 = vld [vmem:[%s181 + $0x4] sm:$0xf]
        %v192 = vld [vmem:[#allocation2] sm:$0xff]
        %v193 = vld [vmem:[#allocation2 + $0x8] sm:$0xff]
        %v194 = vld [vmem:[#allocation2 + $0x10] sm:$0xff]
        %v197 = vunpack.c.l.b16 %v190
        %v198 = vunpack.c.l.b16 %v191
        %v199 = vpack.c.b16 %v198, %v197
        %v203 = vunpack.c.l.b16 %v192
        %v204 = vunpack.c.h.b16 %v192
        %v205 = vunpack.c.l.b16 %v193
        %v206 = vunpack.c.h.b16 %v193
        %v207 = vunpack.c.l.b16 %v194
        %v208 = vunpack.c.h.b16 %v194
        %v209 = vpack.c.b16 %v205, %v203
        %v210 = vpack.c.b16 %v206, %v204
        %v211 = vpack.c.b16 %v207, %v207
        %v212 = vpack.c.b16 %v208, %v208
        %vm215 = vcmask 195584
        %v217 = vsel %vm215, %v199, 0
        %vm219 = vcmask 1043456
        %v221 = vsel %vm219, %v211, 0
        %v224 = vsel %vm219, %v212, 0
        %226 = vmatprep.subr.bf16.mxu0 %v210
        %227 = vmatpush1.bf16.msra.mxu0 %v209
        %228 = vmatprep.subr.bf16.mxu0 %v224
        %229 = vmatpush1.bf16.msra.mxu0 %v221
        %230 = vmatprep.subr.bf16.mxu0 0
        %231 = vmatpush1.bf16.msra.mxu0 0
        %232 = vmatprep.subr.bf16.mxu0 0
        %233 = vmatpush1.bf16.msra.mxu0 0
        %234 = vmatprep.subr.bf16.mxu0 0
        %235 = vmatpush1.bf16.msra.mxu0 0
        %236 = vmatprep.subr.bf16.mxu0 0
        %237 = vmatpush1.bf16.msra.mxu0 0
        %238 = vmatprep.subr.bf16.mxu0 0
        %239 = vmatpush1.bf16.msra.mxu0 0
        %240 = vmatprep.subr.bf16.mxu0 0
        %241 = vmatpush1.bf16.msra.mxu0 0
        %242 = vmatprep.subr.bf16.mxu0 0
        %243 = vmatpush1.bf16.msra.mxu0 0
        %244 = vmatprep.subr.bf16.mxu0 0
        %245 = vmatpush1.bf16.msra.mxu0 0
        %246 = vmatprep.subr.bf16.mxu0 0
        %247 = vmatpush1.bf16.msra.mxu0 0
        %248 = vmatprep.subr.bf16.mxu0 0
        %249 = vmatpush1.bf16.msra.mxu0 0
        %250 = vmatprep.subr.bf16.mxu0 0
        %251 = vmatpush1.bf16.msra.mxu0 0
        %252 = vmatprep.subr.bf16.mxu0 0
        %253 = vmatpush1.bf16.msra.mxu0 0
        %254 = vmatprep.subr.bf16.mxu0 0
        %255 = vmatpush1.bf16.msra.mxu0 0
        %256 = vmatprep.subr.bf16.mxu0 0
        %257 = vmatpush1.bf16.msra.mxu0 0
        %258 = vmatprep.mubr.bf16.mxu0 0
        %259 = vmatmul.mubr.bf16.gmra.mrb[0].mxu0 %v217
        %v260 = vpop.f32.mrb[0].mxu0
        %v261 = vadd.f32 0.0, %v260
        %v262 = vpop.f32.mrb[0].mxu0
        %v263 = vadd.f32 0.0, %v262
        %v264 = vpop.f32.mrb[0].mxu0
        %v265 = vadd.f32 0.0, %v264
        %v266 = vpop.f32.mrb[0].mxu0
        %v267 = vadd.f32 0.0, %v266
        %268 = vdwg.mxu0
        %v269 = vld [vmem:[%s2] ss:$0 sm:$0xff]
        %v270 = vadd.f32 %v261, %v269
        %v271 = vadd.f32 %v265, %v269
        %v272 = vmax.f32 %v270, 0.0
        %v273 = vmax.f32 %v271, 0.0
        %v274 = vpack.c.bf16 %v273, %v272
        %v275 = vld [vmem:[#allocation2 + $0x20] sm:$0xf]
        %v276 = vld [vmem:[#allocation2 + $0x28] sm:$0xf]
        %v277 = vld [vmem:[#allocation2 + $0x30] sm:$0xf]
        %v278 = vld [vmem:[#allocation2 + $0x38] sm:$0xf]
        %v279 = vld [vmem:[#allocation2 + $0x40] sm:$0xf]
        %v280 = vld [vmem:[#allocation2 + $0x48] sm:$0xf]
        %v281 = vld [vmem:[#allocation2 + $0x50] sm:$0xf]
        %v282 = vld [vmem:[#allocation2 + $0x58] sm:$0xf]
        %v283 = vld [vmem:[#allocation2 + $0x60] sm:$0xf]
        %v284 = vld [vmem:[#allocation2 + $0x68] sm:$0xf]
        %v285 = vld [vmem:[#allocation2 + $0x70] sm:$0xf]
        %v286 = vld [vmem:[#allocation2 + $0x78] sm:$0xf]
        %v287 = vld [vmem:[%s2 + $0x1] ss:$0 sm:$0xff]
        %v300 = vunpack.c.l.b16 %v275
        %v301 = vunpack.c.l.b16 %v276
        %v302 = vunpack.c.l.b16 %v277
        %v303 = vunpack.c.l.b16 %v278
        %v304 = vunpack.c.l.b16 %v279
        %v305 = vunpack.c.l.b16 %v280
        %v306 = vunpack.c.l.b16 %v281
        %v307 = vunpack.c.l.b16 %v282
        %v308 = vunpack.c.l.b16 %v283
        %v309 = vunpack.c.l.b16 %v284
        %v310 = vunpack.c.l.b16 %v285
        %v311 = vunpack.c.l.b16 %v286
        %v312 = vpack.c.b16 %v301, %v300
        %v313 = vpack.c.b16 %v303, %v302
        %v314 = vpack.c.b16 %v305, %v304
        %v315 = vpack.c.b16 %v307, %v306
        %v316 = vpack.c.b16 %v309, %v308
        %v317 = vpack.c.b16 %v311, %v310
        %vm324 = vcmask 785408
        %v326 = vsel %vm324, %v274, 0
        %328 = vmatprep.subr.bf16.mxu0 0
        %329 = vmatpush1.bf16.msra.mxu0 %v312
        %330 = vmatprep.subr.bf16.mxu0 0
        %331 = vmatpush1.bf16.msra.mxu0 %v313
        %332 = vmatprep.subr.bf16.mxu0 0
        %333 = vmatpush1.bf16.msra.mxu0 %v314
        %334 = vmatprep.subr.bf16.mxu0 0
        %335 = vmatpush1.bf16.msra.mxu0 %v315
        %336 = vmatprep.subr.bf16.mxu0 0
        %337 = vmatpush1.bf16.msra.mxu0 %v316
        %338 = vmatprep.subr.bf16.mxu0 0
        %339 = vmatpush1.bf16.msra.mxu0 %v317
        %340 = vmatprep.subr.bf16.mxu0 0
        %341 = vmatpush1.bf16.msra.mxu0 0
        %342 = vmatprep.subr.bf16.mxu0 0
        %343 = vmatpush1.bf16.msra.mxu0 0
        %344 = vmatprep.subr.bf16.mxu0 0
        %345 = vmatpush1.bf16.msra.mxu0 0
        %346 = vmatprep.subr.bf16.mxu0 0
        %347 = vmatpush1.bf16.msra.mxu0 0
        %348 = vmatprep.subr.bf16.mxu0 0
        %349 = vmatpush1.bf16.msra.mxu0 0
        %350 = vmatprep.subr.bf16.mxu0 0
        %351 = vmatpush1.bf16.msra.mxu0 0
        %352 = vmatprep.subr.bf16.mxu0 0
        %353 = vmatpush1.bf16.msra.mxu0 0
        %354 = vmatprep.subr.bf16.mxu0 0
        %355 = vmatpush1.bf16.msra.mxu0 0
        %356 = vmatprep.subr.bf16.mxu0 0
        %357 = vmatpush1.bf16.msra.mxu0 0
        %358 = vmatprep.subr.bf16.mxu0 0
        %359 = vmatpush1.bf16.msra.mxu0 0
        %360 = vmatprep.mubr.bf16.mxu0 0
        %361 = vmatmul.mubr.bf16.gmra.mrb[0].mxu0 %v326
        %v362 = vpop.f32.mrb[0].mxu0
        %v363 = vadd.f32 %v287, %v362
        %v364 = vpop.f32.mrb[0].mxu0
        %v365 = vpop.f32.mrb[0].mxu0
        %v366 = vadd.f32 %v287, %v365
        %v367 = vpop.f32.mrb[0].mxu0
        %368 = vdwg.mxu0
        %v369 = vadd.f32 %v363, %v263
        %v370 = vadd.f32 %v366, %v267
        %v371 = vmax.f32 %v369, 0.0
        %v372 = vmax.f32 %v370, 0.0
        %v373 = vpack.c.bf16 %v372, %v371
        %v374 = vld [vmem:[#allocation2 + $0x80] sm:$0xf]
        %v375 = vld [vmem:[#allocation2 + $0x88] sm:$0xf]
        %v376 = vld [vmem:[#allocation2 + $0x90] sm:$0xf]
        %v377 = vld [vmem:[#allocation2 + $0x98] sm:$0xf]
        %v378 = vld [vmem:[#allocation2 + $0xa0] sm:$0xf]
        %v379 = vld [vmem:[#allocation2 + $0xa8] sm:$0xf]
        %v380 = vld [vmem:[%s2 + $0x2] ss:$0 sm:$0xff]
        %v387 = vunpack.c.l.b16 %v374
        %v388 = vunpack.c.l.b16 %v375
        %v389 = vunpack.c.l.b16 %v376
        %v390 = vunpack.c.l.b16 %v377
        %v391 = vunpack.c.l.b16 %v378
        %v392 = vunpack.c.l.b16 %v379
        %v393 = vpack.c.b16 %v388, %v387
        %v394 = vpack.c.b16 %v390, %v389
        %v395 = vpack.c.b16 %v392, %v391
        %vm399 = vcmask 392192
        %v401 = vsel %vm399, %v373, 0
        %403 = vmatprep.subr.bf16.mxu0 0
        %404 = vmatpush1.bf16.msra.mxu0 %v393
        %405 = vmatprep.subr.bf16.mxu0 0
        %406 = vmatpush1.bf16.msra.mxu0 %v394
        %407 = vmatprep.subr.bf16.mxu0 0
        %408 = vmatpush1.bf16.msra.mxu0 %v395
        %409 = vmatprep.subr.bf16.mxu0 0
        %410 = vmatpush1.bf16.msra.mxu0 0
        %411 = vmatprep.subr.bf16.mxu0 0
        %412 = vmatpush1.bf16.msra.mxu0 0
        %413 = vmatprep.subr.bf16.mxu0 0
        %414 = vmatpush1.bf16.msra.mxu0 0
        %415 = vmatprep.subr.bf16.mxu0 0
        %416 = vmatpush1.bf16.msra.mxu0 0
        %417 = vmatprep.subr.bf16.mxu0 0
        %418 = vmatpush1.bf16.msra.mxu0 0
        %419 = vmatprep.subr.bf16.mxu0 0
        %420 = vmatpush1.bf16.msra.mxu0 0
        %421 = vmatprep.subr.bf16.mxu0 0
        %422 = vmatpush1.bf16.msra.mxu0 0
        %423 = vmatprep.subr.bf16.mxu0 0
        %424 = vmatpush1.bf16.msra.mxu0 0
        %425 = vmatprep.subr.bf16.mxu0 0
        %426 = vmatpush1.bf16.msra.mxu0 0
        %427 = vmatprep.subr.bf16.mxu0 0
        %428 = vmatpush1.bf16.msra.mxu0 0
        %429 = vmatprep.subr.bf16.mxu0 0
        %430 = vmatpush1.bf16.msra.mxu0 0
        %431 = vmatprep.subr.bf16.mxu0 0
        %432 = vmatpush1.bf16.msra.mxu0 0
        %433 = vmatprep.subr.bf16.mxu0 0
        %434 = vmatpush1.bf16.msra.mxu0 0
        %435 = vmatprep.mubr.bf16.mxu0 0
        %436 = vmatmul.mubr.bf16.gmra.mrb[0].mxu0 %v401
        %v437 = vpop.f32.mrb[0].mxu0
        %v438 = vadd.f32 %v380, %v437
        %v439 = vpop.f32.mrb[0].mxu0
        %v440 = vpop.f32.mrb[0].mxu0
        %v441 = vadd.f32 %v380, %v440
        %v442 = vpop.f32.mrb[0].mxu0
        %443 = vdwg.mxu0
        %v444 = vmax.f32 %v438, 0.0
        %v445 = vmax.f32 %v441, 0.0
        %v446 = vpack.c.bf16 %v445, %v444
        %v447 = vld [vmem:[#allocation2 + $0xb0] sm:$0xf]
        %v448 = vld [vmem:[#allocation2 + $0xb8] sm:$0xf]
        %v449 = vld [vmem:[#allocation2 + $0xc0] sm:$0xf]
        %v450 = vld [vmem:[%s2 + $0x3] ss:$0 sm:$0xff]
        %v454 = vunpack.c.l.b16 %v447
        %v455 = vunpack.c.l.b16 %v448
        %v456 = vunpack.c.l.b16 %v449
        %v457 = vpack.c.b16 %v455, %v454
        %v458 = vpack.c.b16 %v456, %v456
        %v461 = vsel %vm215, %v446, 0
        %v464 = vsel %vm219, %v458, 0
        %466 = vmatprep.subr.bf16.mxu0 0
        %467 = vmatpush1.bf16.msra.mxu0 %v457
        %468 = vmatprep.subr.bf16.mxu0 0
        %469 = vmatpush1.bf16.msra.mxu0 %v464
        %470 = vmatprep.subr.bf16.mxu0 0
        %471 = vmatpush1.bf16.msra.mxu0 0
        %472 = vmatprep.subr.bf16.mxu0 0
        %473 = vmatpush1.bf16.msra.mxu0 0
        %474 = vmatprep.subr.bf16.mxu0 0
        %475 = vmatpush1.bf16.msra.mxu0 0
        %476 = vmatprep.subr.bf16.mxu0 0
        %477 = vmatpush1.bf16.msra.mxu0 0
        %478 = vmatprep.subr.bf16.mxu0 0
        %479 = vmatpush1.bf16.msra.mxu0 0
        %480 = vmatprep.subr.bf16.mxu0 0
        %481 = vmatpush1.bf16.msra.mxu0 0
        %482 = vmatprep.subr.bf16.mxu0 0
        %483 = vmatpush1.bf16.msra.mxu0 0
        %484 = vmatprep.subr.bf16.mxu0 0
        %485 = vmatpush1.bf16.msra.mxu0 0
        %486 = vmatprep.subr.bf16.mxu0 0
        %487 = vmatpush1.bf16.msra.mxu0 0
        %488 = vmatprep.subr.bf16.mxu0 0
        %489 = vmatpush1.bf16.msra.mxu0 0
        %490 = vmatprep.subr.bf16.mxu0 0
        %491 = vmatpush1.bf16.msra.mxu0 0
        %492 = vmatprep.subr.bf16.mxu0 0
        %493 = vmatpush1.bf16.msra.mxu0 0
        %494 = vmatprep.subr.bf16.mxu0 0
        %495 = vmatpush1.bf16.msra.mxu0 0
        %496 = vmatprep.subr.bf16.mxu0 0
        %497 = vmatpush1.bf16.msra.mxu0 0
        %498 = vmatprep.mubr.bf16.mxu0 0
        %499 = vmatmul.mubr.bf16.gmra.mrb[0].mxu0 %v461
        %v500 = vpop.f32.mrb[0].mxu0
        %v501 = vadd.f32 %v450, %v500
        %v502 = vpop.f32.mrb[0].mxu0
        %v503 = vpop.f32.mrb[0].mxu0
        %v504 = vadd.f32 %v450, %v503
        %v505 = vpop.f32.mrb[0].mxu0
        %506 = vdwg.mxu0
        %v507 = vmax.f32 %v501, 0.0
        %v508 = vmax.f32 %v504, 0.0
        %v509 = vld [vmem:[%s2 + $0x4] ss:$0 sm:$0xff]
        %v510 = vmul.f32 %v507, %v509
        %v511 = vmul.f32 %v508, %v509
        %vm512 = vcmask 97280
        %v513 = vsel %vm512, %v510, 0.0
        %514 = vadd.xlane.f32.xlu0 %v513
        %v515 = vpop.xlane.xlu0 %514
        %v516 = vsel %vm512, %v511, 0.0
        %517 = vadd.xlane.f32.xlu0 %v516
        %v518 = vpop.xlane.xlu0 %517
        %v519 = vld [vmem:[%s2 + $0x5] ss:$0 sm:$0xff]
        %v520 = vadd.f32 %v515, %v519
        %v521 = vadd.f32 %v518, %v519
        %v522 = vsub.f32 0.0, %v520
        %v523 = vsub.f32 0.0, %v521
        %v524 = vmul.f32 %v522, 1.442695
        %v525 = vpow.pop %v524
        %v526 = vmul.f32 %v523, 1.442695
        %v527 = vpow.pop %v526
        %v528 = vadd.f32 %v525, 1.0
        %v529 = vadd.f32 %v527, 1.0
        %v530 = vrcp.pop %v528
        %v531 = vmul.f32 1.0, %v530
        %v532 = vrcp.pop %v529
        %v533 = vmul.f32 1.0, %v532
        %vm534 = vcmask 7168
        %535 = vst.msk [vmem:[%s187] sm:$0xff] %vm534, %v531
        %536 = vst.msk [vmem:[%s187 + $0x8] sm:$0xff] %vm534, %v533
        %s537 = smul.u32 2, %s15
        %p538 = scmp.lt.s32.totalorder %s537, 7
        %s539 = scalar_select %p538, %s537, 7
        %s540 = smul.addr %s539, 8
        %s541 = scalar_lea.vmem %s3, %s540
        // Predicated region
        $region37: #{tpu_custom_call.1} parent=31 // pred_check
          %p542 = pneg %p101
        $region38: #{tpu_custom_call.1} parent=31 // pred_check_branch
          %544 = sbr.rel (%p542) target = $region40
        $region39: #{tpu_custom_call.1} parent=31 // pred_region
          %s545 = smul.u32 2, %s15
        $region40: #{tpu_custom_call.1} parent=31 // pred_fallthru
          _
      $region32: #{tpu_custom_call.1} parent=5 // pred_fallthru
        _
      %p546 = scmp.le.s32.totalorder 2, %s10
      // Predicated region
      $region41: #{tpu_custom_call.1} parent=5 // pred_check
        %p547 = pneg %p546
      $region42: #{tpu_custom_call.1} parent=5 // pred_check_branch
        %549 = sbr.rel (%p547) target = $region44
      $region43: #{tpu_custom_call.1} parent=5 // pred_region
        %s550 = ssub.s32 %s10, 2
        // Predicated region
        $region45: #{tpu_custom_call.1} parent=43 // pred_check
          %p551 = pneg %p107
        $region46: #{tpu_custom_call.1} parent=43 // pred_check_branch
          %553 = sbr.rel (%p551) target = $region48
        $region47: #{tpu_custom_call.1} parent=43 // pred_region
          %s554 = smul.u32 2, %s16
          %p555 = scmp.lt.s32.totalorder %s554, 7
          %s556 = scalar_select %p555, %s554, 7
          %s557 = smul.addr %s556, 8
          %s558 = scalar_lea.vmem %s3, %s557
        $region48: #{tpu_custom_call.1} parent=43 // pred_fallthru
          _
      $region44: #{tpu_custom_call.1} parent=5 // pred_fallthru
        _
    $region6: #{tpu_custom_call.1} parent=1 // loop_footer
      %s14 = sadd.s32 1, %s10
    $region7: #{tpu_custom_call.1} parent=1 // loop_footer_branch
      %9 = sbr.rel target = $region3
    $region8: #{tpu_custom_call.1} parent=1 // loop_exit
      _
    %559 = vsyncpa [#allocation3], 1
    %s560 = scalar_lea.sflag [#allocation3], 1
    %561 = vsyncpa %s560, 1

</llo_original>
